<compile_context>
chip_gen: v7x
topology: tpu7x:2x2x1
jax: 0.10.0
libtpu: 0.0.40
codegen_flags: <defaults>
</compile_context>

<pallas_src>
import jax
import jax.numpy as jnp
from jax.experimental import pallas as pl
from jax.experimental.pallas import tpu as pltpu

LANES = 128


def _lacu_kernel(params_ref, x_ref, o_ref):
    # Learned scalars from SMEM: [alpha, beta, gamma].
    a = params_ref[0]
    b = params_ref[1]
    g = params_ref[2]

    # Constant subtracted on the x < 0 branch of the reference:
    #   neg_part(x<0) = where(0 > gamma, 0, 1)  ->  1 if gamma >= 0 else 0.
    c_neg = jnp.where(g >= 0.0, 1.0, 0.0)

    x = x_ref[...].astype(jnp.float32)
    x2 = x * x
    neg = x < 0.0

    # One reciprocal per element (exact divide: kernel is HBM-bound in f32, and
    # the approximate vrcp failed the 2e-3 accuracy check).
    denom = 1.0 + jnp.where(neg, a, b) * x2
    r = 1.0 / denom

    # x <  0 : 1/(1 + alpha*x^2) - (gamma >= 0 ? 1 : 0)
    # x >= 0 : x^2 > gamma ? 1 - gamma*x : 1 - 1/(1 + beta*x^2)
    out_neg = r - c_neg
    out_pos = jnp.where(x2 > g, 1.0 - g * x, 1.0 - r)

    o_ref[...] = jnp.where(neg, out_neg, out_pos).astype(o_ref.dtype)


def _lacu_jax(x, alpha, beta, gamma):
    """Pure-JAX reference mirroring the PyTorch forward (also used for tails)."""
    x = x.astype(jnp.float32)
    relu_x = jnp.maximum(x, 0.0)
    relu_neg_x = jnp.maximum(-x, 0.0)
    relu_neg_x_sq = relu_neg_x * relu_neg_x
    relu_x_sq = relu_x * relu_x
    pos_part = 1.0 / (1.0 + alpha * relu_neg_x_sq)
    neg_part = jnp.where(relu_x_sq > gamma, gamma * relu_x,
                         1.0 / (1.0 + beta * relu_x_sq))
    return pos_part - neg_part


def _pick_block_rows(rows, requested):
    br = min(requested, rows)
    # Split into at least two grid blocks when possible so the "parallel" grid
    # axis can be sharded across v7x's two TensorCores.
    if br == rows and rows >= 16:
        br = -(-rows // 2)  # ceil(rows / 2)
    if br != rows:
        br = max(8, (br // 8) * 8)  # keep the sublane dim a multiple of 8
    return br


def lacu_pallas(x, alpha, beta, gamma, *, block_rows=8192):
    """Apply LACU elementwise to x (any shape, native dtype I/O)."""
    orig_shape = x.shape
    dtype = x.dtype
    n = x.size

    params = jnp.asarray([alpha, beta, gamma], dtype=jnp.float32)

    xf = x.reshape(-1)
    n_main = (n // LANES) * LANES
    rem = n - n_main

    out_parts = []
    if n_main:
        rows = n_main // LANES
        x2d = xf[:n_main].reshape(rows, LANES)

        br = _pick_block_rows(rows, block_rows)
        grid = (pl.cdiv(rows, br),)

        elem_bytes = jnp.dtype(dtype).itemsize
        cost = pl.CostEstimate(
            flops=9 * n_main,
            transcendentals=n_main,
            bytes_accessed=2 * n_main * elem_bytes,
        )

        out2d = pl.pallas_call(
            _lacu_kernel,
            out_shape=jax.ShapeDtypeStruct((rows, LANES), dtype),
            grid=grid,
            in_specs=[
                pl.BlockSpec(memory_space=pltpu.SMEM),           # [alpha, beta, gamma]
                pl.BlockSpec((br, LANES), lambda i: (i, 0)),     # x tile
            ],
            out_specs=pl.BlockSpec((br, LANES), lambda i: (i, 0)),
            compiler_params=pltpu.CompilerParams(
                dimension_semantics=("parallel",),
                # Headroom for 4 MiB tiles: in + out, double-buffered = 16 MiB.
                # 32 MiB is safe on every chip (v5e/v6e 128 MiB, v7x 64 MiB).
                vmem_limit_bytes=32 << 20,
            ),
            cost_estimate=cost,
        )(params, x2d)
        out_parts.append(out2d.reshape(-1))

    if rem:
        # < 128 trailing elements: compute in plain JAX; avoids a full-array
        # pad + slice round trip (which would double HBM traffic).
        tail = _lacu_jax(xf[n_main:], alpha, beta, gamma).astype(dtype)
        out_parts.append(tail)

    out = out_parts[0] if len(out_parts) == 1 else jnp.concatenate(out_parts)
    return out.reshape(orig_shape)


def lacu_ref(x, alpha, beta, gamma):
    return _lacu_jax(x, alpha, beta, gamma)


if __name__ == "__main__":
    key = jax.random.PRNGKey(0)
    # NCHW, matching PyTorch conventions for a small example.
    x = jax.random.normal(key, (2, 4, 16, 16), dtype=jnp.float32) * 2.0

    # Parameters matching nn.Parameter(torch.tensor(1.0)) init.
    alpha, beta, gamma = 1.0, 1.0, 1.0

    out = lacu_pallas(x, alpha, beta, gamma)
    out = jax.block_until_ready(out)
    ref = lacu_ref(x, alpha, beta, gamma)
    assert out.shape == x.shape
    assert out.dtype == x.dtype
    assert jnp.allclose(out, ref, atol=1e-5, rtol=1e-5), "mismatch vs reference"

    # Negative gamma exercises the other branch of the scalar select.
    out_ng = jax.block_until_ready(lacu_pallas(x, 0.7, 1.3, -0.5))
    ref_ng = lacu_ref(x, 0.7, 1.3, -0.5)
    assert jnp.allclose(out_ng, ref_ng, atol=1e-5, rtol=1e-5), "mismatch (gamma<0)"

    # Ragged size (n % 128 != 0) exercises the pure-JAX tail path.
    xr = jax.random.normal(jax.random.PRNGKey(1), (3, 5, 7, 11), dtype=jnp.float32)
    out_r = jax.block_until_ready(lacu_pallas(xr, alpha, beta, gamma))
    ref_r = lacu_ref(xr, alpha, beta, gamma)
    assert out_r.shape == xr.shape
    assert jnp.allclose(out_r, ref_r, atol=1e-5, rtol=1e-5), "mismatch (ragged)"

    print("KERNEL_OK")
</pallas_src>

<mosaic_0001>
module attributes {stable_mosaic.version = 11 : i64} {
  func.func @_lacu_kernel(%arg0: i32, %arg1: memref<3xf32, #tpu.memory_space<smem>>, %arg2: memref<8x128xf32, #tpu.memory_space<vmem>>, %arg3: memref<8x128xf32, #tpu.memory_space<vmem>>) attributes {dimension_semantics = [#tpu.dimension_semantics<parallel>], iteration_bounds = array<i64: 2>, scalar_prefetch = 0 : i64, scratch_operands = 0 : i64, tpu.core_type = #tpu.core_type<tc>, window_params = [{transform_indices = @transform_0, window_bounds = array<i64: 3>}, {transform_indices = @transform_1, window_bounds = array<i64: 8, 128>}, {transform_indices = @transform_2, window_bounds = array<i64: 8, 128>}]} {
    %c0 = arith.constant 0 : index
    %0 = memref.load %arg1[%c0] : memref<3xf32, #tpu.memory_space<smem>>
    %c1 = arith.constant 1 : index
    %1 = memref.load %arg1[%c1] : memref<3xf32, #tpu.memory_space<smem>>
    %c2 = arith.constant 2 : index
    %2 = memref.load %arg1[%c2] : memref<3xf32, #tpu.memory_space<smem>>
    %cst = arith.constant 0.000000e+00 : f32
    %3 = arith.cmpf oge, %2, %cst : f32
    %cst_0 = arith.constant 1.000000e+00 : f32
    %cst_1 = arith.constant 0.000000e+00 : f32
    %4 = arith.select %3, %cst_0, %cst_1 : f32
    %c0_2 = arith.constant 0 : index
    %c0_3 = arith.constant 0 : index
    %5 = vector.load %arg2[%c0_2, %c0_3] : memref<8x128xf32, #tpu.memory_space<vmem>>, vector<8x128xf32>
    %6 = arith.mulf %5, %5 : vector<8x128xf32>
    %cst_4 = arith.constant 0.000000e+00 : f32
    %7 = vector.broadcast %cst_4 : f32 to vector<8x128xf32>
    %8 = arith.cmpf olt, %5, %7 : vector<8x128xf32>
    %9 = vector.broadcast %0 : f32 to vector<8x128xf32>
    %10 = vector.broadcast %1 : f32 to vector<8x128xf32>
    %11 = arith.select %8, %9, %10 : vector<8x128xi1>, vector<8x128xf32>
    %12 = arith.mulf %11, %6 : vector<8x128xf32>
    %cst_5 = arith.constant 1.000000e+00 : f32
    %13 = vector.broadcast %cst_5 : f32 to vector<8x128xf32>
    %14 = arith.addf %13, %12 : vector<8x128xf32>
    %cst_6 = arith.constant 1.000000e+00 : f32
    %15 = vector.broadcast %cst_6 : f32 to vector<8x128xf32>
    %16 = arith.divf %15, %14 : vector<8x128xf32>
    %17 = vector.broadcast %4 : f32 to vector<8x128xf32>
    %18 = arith.subf %16, %17 : vector<8x128xf32>
    %19 = vector.broadcast %2 : f32 to vector<8x128xf32>
    %20 = arith.cmpf ogt, %6, %19 : vector<8x128xf32>
    %21 = vector.broadcast %2 : f32 to vector<8x128xf32>
    %22 = arith.mulf %21, %5 : vector<8x128xf32>
    %cst_7 = arith.constant 1.000000e+00 : f32
    %23 = vector.broadcast %cst_7 : f32 to vector<8x128xf32>
    %24 = arith.subf %23, %22 : vector<8x128xf32>
    %cst_8 = arith.constant 1.000000e+00 : f32
    %25 = vector.broadcast %cst_8 : f32 to vector<8x128xf32>
    %26 = arith.subf %25, %16 : vector<8x128xf32>
    %27 = arith.select %20, %24, %26 : vector<8x128xi1>, vector<8x128xf32>
    %28 = arith.select %8, %18, %27 : vector<8x128xi1>, vector<8x128xf32>
    %c0_9 = arith.constant 0 : index
    %c0_10 = arith.constant 0 : index
    %29 = vector.load %arg3[%c0_9, %c0_10] : memref<8x128xf32, #tpu.memory_space<vmem>>, vector<8x128xf32>
    tpu.vector_store %arg3[%c0_9, %c0_10], %28 {strides = array<i32>} : memref<8x128xf32, #tpu.memory_space<vmem>>, vector<8x128xf32>,
    return
  }
  func.func @transform_0(%arg0: i32) -> i32 {
    %c0_i32 = arith.constant 0 : i32
    %c0_i32_0 = arith.constant 0 : i32
    return %c0_i32 : i32
  }
  func.func @transform_1(%arg0: i32) -> (i32, i32) {
    %c0_i32 = arith.constant 0 : i32
    %c0_i32_0 = arith.constant 0 : i32
    return %arg0, %c0_i32 : i32, i32
  }
  func.func @transform_2(%arg0: i32) -> (i32, i32) {
    %c0_i32 = arith.constant 0 : i32
    %c0_i32_0 = arith.constant 0 : i32
    return %arg0, %c0_i32 : i32, i32
  }
}

</mosaic_0001>

<llo_original>
// kernel: tpu_custom_call.1
$region0: #{tpu_custom_call.1}
  #allocation0 [shape = 'u32[]', space=smem, size = 0x4, offset = 0x4, fixed_abs, tag = 'smem constant byte address 0x4 - core index']
  #allocation1 [shape = 'u32[144,128]{1,0:T(1,128)}', space=vmem, size = 0x12000, scoped, tag = 'internal scratch']
  %s0 = inlined_call_operand.hbm [shape: f32[3], index: 0, kind: input, shape index: {}]
  %s1 = inlined_call_operand.hbm [shape: f32[16,128], index: 1, kind: input, shape index: {}]
  %s2 = inlined_call_operand.hbm [shape: f32[16,128], index: 2, kind: output, shape index: {}]
  %s3 = sld [smem:[#allocation0]]
  $region49: #{tpu_custom_call.1} parent=0
    _
  %s5 = ssub.s32 1, %s3
  %s6 = scalar_select 0, %s5, %s3
  $region1: #{tpu_custom_call.1} parent=0
    #allocation2 [shape = 'u8[512]{0}', space=smem, size = 0x200, scoped, tag = 'input window, operand 0, single buffered']
    #allocation3 [shape = 's32[2]{0}', space=sflag, size = 0x8, scoped, tag = 'scoped memory for tpu_custom_call.1']
    #allocation4 [shape = 's32[2]{0}', space=sflag, size = 0x8, scoped, tag = 'scoped memory for tpu_custom_call.1']
    #allocation5 [shape = 's32[2]{0}', space=sflag, size = 0x8, scoped, tag = 'scoped memory for tpu_custom_call.1']
    #allocation6 [shape = 'u8[8192]{0}', space=vmem, size = 0x2000, scoped, tag = 'input window, operand 1']
    #allocation7 [shape = 'u8[8192]{0}', space=vmem, size = 0x2000, scoped, tag = 'output window, operand 0']
    %7 = vsyncpa [#allocation5], 0
    %8 = vsyncpa [#allocation3], 0
    %s9 = scalar_lea.sflag [#allocation3], 1
    %10 = vsyncpa %s9, 0
    %11 = vsyncpa [#allocation4], 0
    %s12 = scalar_lea.sflag [#allocation4], 1
    %13 = vsyncpa %s12, 0
    loop: start=0, step=1, limit=4
    $region2: #{tpu_custom_call.1} parent=1 // loop_pre_header
      _
    $region3: #{tpu_custom_call.1} parent=1 // loop_header
      %s15 = sphi 0, %s19
      %p16 = scmp.ge.s32.totalorder %s15, 4
      %s23 = sphi 0, %s23
      %s25 = sphi 0, %s23
      %s26 = sphi 0, %s25
      %s40 = sphi 0, %s26
      %s46 = sphi 0, %s48
      %s49 = sphi 0, %s46
      %s50 = sphi 0, %s49
      %s66 = sphi 0, %s50
      %s72 = sphi 0, %s74
      %s75 = sphi 0, %s72
      %s76 = sphi 0, %s75
      %s92 = sphi 0, %s76
    $region4: #{tpu_custom_call.1} parent=1 // loop_header_branch
      %18 = sbr.rel (%p16) target = $region8
    $region5: #{tpu_custom_call.1} parent=1 // loop_body
      %s20 = ssub.s32 %s15, 1
      %s21 = ssub.s32 %s15, 2
      %s22 = sadd.s32 %s15, 1
      %s24 = sadd.s32 %s23, 1
      %p27 = scmp.eq.s32.totalorder %s15, 1
      %p28 = scmp.ne.s32.totalorder %s23, %s25
      %p29 = scmp.eq.s32.totalorder %s15, 0
      %p30 = por %p28, %p29
      %p31 = scmp.ne.s32.totalorder %s23, %s25
      %p32 = scmp.eq.s32.totalorder %s20, 1
      %p33 = por %p31, %p32
      %p34 = scmp.ne.s32.totalorder %s25, %s26
      %p35 = scmp.eq.s32.totalorder %s20, 0
      %p36 = por %p34, %p35
      %p37 = scmp.ne.s32.totalorder %s25, %s26
      %p38 = scmp.eq.s32.totalorder %s21, 1
      %p39 = por %p37, %p38
      %p41 = scmp.ne.s32.totalorder %s26, %s40
      %p42 = scmp.eq.s32.totalorder %s21, 0
      %p43 = por %p41, %p42
      %s44 = ssub.s32 %s15, %s22
      %p45 = scmp.eq.s32.totalorder %s44, 0
      %s47 = sadd.s32 %s46, 1
      %s48 = scalar_select %p45, %s46, %s47
      %p51 = pneg %p45
      %p52 = scmp.eq.s32.totalorder %s15, 1
      %p53 = por %p51, %p52
      %p54 = scmp.ne.s32.totalorder %s46, %s49
      %p55 = scmp.eq.s32.totalorder %s15, 0
      %p56 = por %p54, %p55
      %p57 = scmp.ne.s32.totalorder %s46, %s49
      %p58 = scmp.eq.s32.totalorder %s20, 1
      %p59 = por %p57, %p58
      %p60 = scmp.ne.s32.totalorder %s49, %s50
      %p61 = scmp.eq.s32.totalorder %s20, 0
      %p62 = por %p60, %p61
      %p63 = scmp.ne.s32.totalorder %s49, %s50
      %p64 = scmp.eq.s32.totalorder %s21, 1
      %p65 = por %p63, %p64
      %p67 = scmp.ne.s32.totalorder %s50, %s66
      %p68 = scmp.eq.s32.totalorder %s21, 0
      %p69 = por %p67, %p68
      %s70 = ssub.s32 %s15, %s22
      %p71 = scmp.eq.s32.totalorder %s70, 0
      %s73 = sadd.s32 %s72, 1
      %s74 = scalar_select %p71, %s72, %s73
      %p77 = pneg %p71
      %p78 = scmp.eq.s32.totalorder %s15, 1
      %p79 = por %p77, %p78
      %p80 = scmp.ne.s32.totalorder %s72, %s75
      %p81 = scmp.eq.s32.totalorder %s15, 0
      %p82 = por %p80, %p81
      %p83 = scmp.ne.s32.totalorder %s72, %s75
      %p84 = scmp.eq.s32.totalorder %s20, 1
      %p85 = por %p83, %p84
      %p86 = scmp.ne.s32.totalorder %s75, %s76
      %p87 = scmp.eq.s32.totalorder %s20, 0
      %p88 = por %p86, %p87
      %p89 = scmp.ne.s32.totalorder %s75, %s76
      %p90 = scmp.eq.s32.totalorder %s21, 1
      %p91 = por %p89, %p90
      %p93 = scmp.ne.s32.totalorder %s76, %s92
      %p94 = scmp.eq.s32.totalorder %s21, 0
      %p95 = por %p93, %p94
      %p96 = scmp.le.s32.totalorder 1, %s15
      %p97 = scmp.lt.s32.totalorder %s15, 3
      %p98 = pnand %p96, %p97
      %p99 = pneg %p98
      // Predicated region
      $region9: #{tpu_custom_call.1} parent=5 // pred_check
        _
      $region10: #{tpu_custom_call.1} parent=5 // pred_check_branch
        %101 = sbr.rel (%p98) target = $region12
      $region11: #{tpu_custom_call.1} parent=5 // pred_region
        %s102 = ssub.s32 %s15, 1
        // Predicated region
        $region13: #{tpu_custom_call.1} parent=11 // pred_check
          %p103 = pneg %p36
        $region14: #{tpu_custom_call.1} parent=11 // pred_check_branch
          %105 = sbr.rel (%p103) target = $region16
        $region15: #{tpu_custom_call.1} parent=11 // pred_region
          %s107 = ssub.s32 16, 16
          %108 = vsyncadd [#allocation5], %s107
          %111 = dma.hbm_to_smem %s0, 16, [#allocation2], [#allocation5]
        $region16: #{tpu_custom_call.1} parent=11 // pred_fallthru
          _
      $region12: #{tpu_custom_call.1} parent=5 // pred_fallthru
        _
      %p112 = scmp.lt.s32.totalorder %s15, 2
      // Predicated region
      $region17: #{tpu_custom_call.1} parent=5 // pred_check
        %p113 = pneg %p112
      $region18: #{tpu_custom_call.1} parent=5 // pred_check_branch
        %115 = sbr.rel (%p113) target = $region20
      $region19: #{tpu_custom_call.1} parent=5 // pred_region
        // Predicated region
        $region21: #{tpu_custom_call.1} parent=19 // pred_check
          %p116 = pneg %p56
        $region22: #{tpu_custom_call.1} parent=19 // pred_check_branch
          %118 = sbr.rel (%p116) target = $region24
        $region23: #{tpu_custom_call.1} parent=19 // pred_region
          %s119 = sand.u32 %s46, 1
          %s120 = scalar_lea.sflag [#allocation3], %s119
          %s121 = sand.u32 %s46, 1
          %s122 = smul.addr %s121, 8
          %s123 = scalar_lea.vmem [#allocation6], %s122
          %s125 = ssub.s32 128, 128
          %126 = vsyncadd %s120, %s125
          %s127 = smul.addr %s15, 128
          %s128 = scalar_lea.hbm %s1, %s127
          %s130 = sshll.u32 %s123, 4
          %s131 = int_to_ptr.vmem [resolvable:$true] %s130
          %133 = dma.hbm_to_vmem [thread:$0]  %s128, 128, %s131, %s120
        $region24: #{tpu_custom_call.1} parent=19 // pred_fallthru
          _
      $region20: #{tpu_custom_call.1} parent=5 // pred_fallthru
        _
      %p134 = scmp.le.s32.totalorder 1, %s15
      %p135 = scmp.lt.s32.totalorder %s15, 3
      %p136 = pnand %p134, %p135
      %p137 = pneg %p136
      // Predicated region
      $region25: #{tpu_custom_call.1} parent=5 // pred_check
        _
      $region26: #{tpu_custom_call.1} parent=5 // pred_check_branch
        %139 = sbr.rel (%p136) target = $region28
      $region27: #{tpu_custom_call.1} parent=5 // pred_region
        %s140 = ssub.s32 %s15, 1
        // Predicated region
        $region29: #{tpu_custom_call.1} parent=27 // pred_check
          %p141 = pneg %p36
        $region30: #{tpu_custom_call.1} parent=27 // pred_check_branch
          %143 = sbr.rel (%p141) target = $region32
        $region31: #{tpu_custom_call.1} parent=27 // pred_region
          %144 = dma.done [#allocation5], 16
        $region32: #{tpu_custom_call.1} parent=27 // pred_fallthru
          _
        %s145 = sand.u32 %s49, 1
        %s146 = scalar_lea.sflag [#allocation3], %s145
        %s147 = sand.u32 %s49, 1
        %s148 = smul.addr %s147, 8
        %s149 = scalar_lea.vmem [#allocation6], %s148
        // Predicated region
        $region33: #{tpu_custom_call.1} parent=27 // pred_check
          %p150 = pneg %p62
        $region34: #{tpu_custom_call.1} parent=27 // pred_check_branch
          %152 = sbr.rel (%p150) target = $region36
        $region35: #{tpu_custom_call.1} parent=27 // pred_region
          %153 = dma.done %s146, 128
        $region36: #{tpu_custom_call.1} parent=27 // pred_fallthru
          _
        %154 = sfence
        %p155 = pneg %p36
        %p156 = pneg %p33
        %s157 = sand.u32 %s49, 1
        %s158 = scalar_lea.sflag [#allocation3], %s157
        %s159 = sand.u32 %s49, 1
        %s160 = smul.addr %s159, 8
        %s161 = scalar_lea.vmem [#allocation6], %s160
        %p162 = pneg %p62
        %p163 = pneg %p59
        %p164 = pneg %p88
        %p165 = pneg %p85
        %s166 = sand.u32 %s75, 1
        %s167 = scalar_lea.sflag [#allocation4], %s166
        %s168 = sand.u32 %s75, 1
        %s169 = smul.addr %s168, 8
        %s170 = scalar_lea.vmem [#allocation7], %s169
        %s171 = sld [smem:[#allocation2]]
        %s172 = sld [smem:[#allocation2 + $0x1]]
        %s173 = sld [smem:[#allocation2 + $0x2]]
        %p174 = scmp.ge.f32.partialorder %s173, 0.0
        %s175 = scalar_select %p174, 1.0, 0.0
        %v176 = vld [vmem:[%s149] sm:$0xff]
        %v177 = vmul.f32 %v176, %v176
        %vm178 = vcmp.lt.f32.partialorder %v176, 0.0
        %v179 = vstv %s171
        %v180 = vstv %s172
        %v181 = vsel %vm178, %v179, %v180
        %v182 = vmul.f32 %v181, %v177
        %v183 = vadd.f32 %v182, 1.0
        %v184 = vrcp.pop %v183
        %v185 = vmul.f32 1.0, %v184
        %v186 = vstv %s175
        %v187 = vsub.f32 %v185, %v186
        %v188 = vstv %s173
        %vm189 = vcmp.gt.f32.partialorder %v177, %v188
        %v190 = vmul.f32 %v188, %v176
        %v191 = vsub.f32 1.0, %v190
        %v192 = vsub.f32 1.0, %v185
        %v193 = vsel %vm189, %v191, %v192
        %v194 = vsel %vm178, %v187, %v193
        %195 = vst [vmem:[%s170] sm:$0xff] %v194
        %s196 = sand.u32 %s75, 1
        %s197 = scalar_lea.sflag [#allocation4], %s196
        %s198 = sand.u32 %s75, 1
        %s199 = smul.addr %s198, 8
        %s200 = scalar_lea.vmem [#allocation7], %s199
        // Predicated region
        $region37: #{tpu_custom_call.1} parent=27 // pred_check
          %p201 = pneg %p85
        $region38: #{tpu_custom_call.1} parent=27 // pred_check_branch
          %203 = sbr.rel (%p201) target = $region40
        $region39: #{tpu_custom_call.1} parent=27 // pred_region
          %s205 = ssub.s32 128, 128
          %206 = vsyncadd %s197, %s205
          %s207 = smul.addr %s20, 128
          %s208 = scalar_lea.hbm %s2, %s207
          %s210 = sshll.u32 %s200, 4
          %s211 = int_to_ptr.vmem [resolvable:$true] %s210
          %213 = dma.vmem_to_hbm [thread:$0]  %s211, 128, %s208, %s197
        $region40: #{tpu_custom_call.1} parent=27 // pred_fallthru
          _
      $region28: #{tpu_custom_call.1} parent=5 // pred_fallthru
        _
      %p214 = scmp.le.s32.totalorder 2, %s15
      // Predicated region
      $region41: #{tpu_custom_call.1} parent=5 // pred_check
        %p215 = pneg %p214
      $region42: #{tpu_custom_call.1} parent=5 // pred_check_branch
        %217 = sbr.rel (%p215) target = $region44
      $region43: #{tpu_custom_call.1} parent=5 // pred_region
        %s218 = ssub.s32 %s15, 2
        // Predicated region
        $region45: #{tpu_custom_call.1} parent=43 // pred_check
          %p219 = pneg %p91
        $region46: #{tpu_custom_call.1} parent=43 // pred_check_branch
          %221 = sbr.rel (%p219) target = $region48
        $region47: #{tpu_custom_call.1} parent=43 // pred_region
          %s222 = sand.u32 %s76, 1
          %s223 = scalar_lea.sflag [#allocation4], %s222
          %s224 = sand.u32 %s76, 1
          %s225 = smul.addr %s224, 8
          %s226 = scalar_lea.vmem [#allocation7], %s225
          %227 = dma.done %s223, 128
        $region48: #{tpu_custom_call.1} parent=43 // pred_fallthru
          _
      $region44: #{tpu_custom_call.1} parent=5 // pred_fallthru
        _
    $region6: #{tpu_custom_call.1} parent=1 // loop_footer
      %s19 = sadd.s32 1, %s15
    $region7: #{tpu_custom_call.1} parent=1 // loop_footer_branch
      %14 = sbr.rel target = $region3
    $region8: #{tpu_custom_call.1} parent=1 // loop_exit
      _
    %228 = vsyncpa [#allocation3], 1
    %s229 = scalar_lea.sflag [#allocation3], 1
    %230 = vsyncpa %s229, 1
    %231 = vsyncpa [#allocation4], 1
    %s232 = scalar_lea.sflag [#allocation4], 1
    %233 = vsyncpa %s232, 1
    %234 = vsyncpa [#allocation5], 1
    %s235 = scalar_lea.sflag [#allocation5], 1
    %236 = vsyncpa %s235, 1

</llo_original>
